<compile_context>
chip_gen: v6e
topology: v6e:2x2x1
jax: 0.10.0
libtpu: 0.0.40
codegen_flags: <defaults>
</compile_context>

<pallas_src>
import functools

import jax
import jax.numpy as jnp
from jax.experimental import pallas as pl
from jax.experimental.pallas import tpu as pltpu


def node_model_kernel(x_ref, ea_ref, oh_ref,
                      w1x_ref, w1a_ref, b1_ref, w2_ref, b2_ref, w3_ref, b3_ref,
                      out_ref):
    # x_ref  : (1, tile_n, Hp)  node-feature row tile of batch b
    # ea_ref : (1, E, Hp)       all edge features of batch b (constant over row tiles)
    # oh_ref : (tile_n, E)      one-hot scatter rows (batch-invariant, shared)
    # w1x/w1a: (Hp, Hp)         split halves of W1 (x-part, agg-part)
    # w2, w3 : (Hp, Hp); b1, b2, b3 : (1, Hp)
    # out_ref: (1, tile_n, Hp)
    x = x_ref[0]
    ea = ea_ref[0]

    # scatter_add(edge_attr, dest) for this row tile: one MXU matmul, f32 accumulation.
    agg = jnp.dot(oh_ref[...], ea, preferred_element_type=jnp.float32)

    # concat([x, agg]) @ W1  ==  x @ W1[:H] + agg @ W1[H:]   (no concat / lane relayout)
    h = (jnp.dot(x, w1x_ref[...], preferred_element_type=jnp.float32)
         + jnp.dot(agg, w1a_ref[...], preferred_element_type=jnp.float32)
         + b1_ref[...])
    h = h * jax.nn.sigmoid(h)                     # SiLU

    h = jnp.dot(h, w2_ref[...], preferred_element_type=jnp.float32) + b2_ref[...]
    h = h * jax.nn.sigmoid(h)                     # SiLU

    h = jnp.dot(h, w3_ref[...], preferred_element_type=jnp.float32) + b3_ref[...]

    out_ref[0] = h.astype(out_ref.dtype)


@functools.partial(jax.jit, static_argnames=("row_tile",))
def node_model_forward(x, edge_index, edge_attr, params, *, row_tile=256):
    """x: [B, N, H] f32, edge_index: [2, E] i32, edge_attr: [B, E, H] f32."""
    B, N, H = x.shape
    E = edge_attr.shape[1]
    dest = edge_index[1].astype(jnp.int32)

    w1, b1, w2, b2, w3, b3 = params

    # Lane-dense padding: H -> Hp (multiple of 128).  Zero padding is exact end-to-end.
    Hp = ((H + 127) // 128) * 128
    # Node-row tiling: tile_n a multiple of 8, N padded up to a multiple of it.
    tile_n = min(row_tile, N)
    tile_n = ((tile_n + 7) // 8) * 8
    Np = pl.cdiv(N, tile_n) * tile_n

    x_p = jnp.pad(x, [(0, 0), (0, Np - N), (0, Hp - H)])
    ea_p = jnp.pad(edge_attr, [(0, 0), (0, 0), (0, Hp - H)])

    w1x = jnp.pad(w1[:H], [(0, Hp - H), (0, Hp - H)])     # x-half of W1
    w1a = jnp.pad(w1[H:], [(0, Hp - H), (0, Hp - H)])     # agg-half of W1
    w2_p = jnp.pad(w2, [(0, Hp - H), (0, Hp - H)])
    w3_p = jnp.pad(w3, [(0, Hp - H), (0, Hp - H)])
    b1_p = jnp.pad(b1.reshape(1, H), [(0, 0), (0, Hp - H)])
    b2_p = jnp.pad(b2.reshape(1, H), [(0, 0), (0, Hp - H)])
    b3_p = jnp.pad(b3.reshape(1, H), [(0, 0), (0, Hp - H)])

    # One (Np, E) one-hot, reused for every batch via a constant-over-b index_map.
    # Padded node rows (n >= N) are all-zero automatically.
    oh = (jnp.arange(Np, dtype=jnp.int32)[:, None] == dest[None, :]).astype(x.dtype)

    grid = (B, Np // tile_n)

    resident = lambda shape: pl.BlockSpec(shape, lambda b, i: tuple(0 for _ in shape))

    out_p = pl.pallas_call(
        node_model_kernel,
        out_shape=jax.ShapeDtypeStruct((B, Np, Hp), x.dtype),
        grid_spec=pltpu.PrefetchScalarGridSpec(
            num_scalar_prefetch=0,
            grid=grid,
            in_specs=[
                pl.BlockSpec((1, tile_n, Hp), lambda b, i: (b, i, 0)),   # x row tile
                pl.BlockSpec((1, E, Hp),      lambda b, i: (b, 0, 0)),   # edge_attr (per batch)
                pl.BlockSpec((tile_n, E),     lambda b, i: (i, 0)),      # one-hot (batch-invariant)
                resident((Hp, Hp)),   # W1 x-half
                resident((Hp, Hp)),   # W1 agg-half
                resident((1, Hp)),    # b1
                resident((Hp, Hp)),   # W2
                resident((1, Hp)),    # b2
                resident((Hp, Hp)),   # W3
                resident((1, Hp)),    # b3
            ],
            out_specs=pl.BlockSpec((1, tile_n, Hp), lambda b, i: (b, i, 0)),
        ),
        compiler_params=pltpu.CompilerParams(
            dimension_semantics=("parallel", "parallel"),
            vmem_limit_bytes=48 * 1024 * 1024,
        ),
    )(x_p, ea_p, oh, w1x, w1a, b1_p, w2_p, b2_p, w3_p, b3_p)

    return out_p[:, :N, :H]


def node_model_reference(x, edge_index, edge_attr, params):
    """Pure-JAX reference for correctness checking."""
    B, N, H = x.shape
    dest = edge_index[1]
    agg = jax.vmap(lambda ea: jax.ops.segment_sum(ea, dest, num_segments=N))(edge_attr)
    h = jnp.concatenate([x, agg], axis=-1)
    w1, b1, w2, b2, w3, b3 = params
    h = jax.nn.silu(h @ w1 + b1)
    h = jax.nn.silu(h @ w2 + b2)
    h = h @ w3 + b3
    return h


if __name__ == "__main__":
    # mlp_layers = 3, hidden_channels = 32
    B, N, E, H = 2, 16, 24, 32

    key = jax.random.PRNGKey(0)
    k_x, k_ea, k_ei, k_w1, k_b1, k_w2, k_b2, k_w3, k_b3 = jax.random.split(key, 9)

    x = jax.random.normal(k_x, (B, N, H), dtype=jnp.float32)
    edge_attr = jax.random.normal(k_ea, (B, E, H), dtype=jnp.float32)
    edge_index = jax.random.randint(k_ei, (2, E), 0, N, dtype=jnp.int32)

    # Deterministic parameter init (JAX (in, out) convention: y = x @ W + b).
    scale = 0.1
    params = (
        scale * jax.random.normal(k_w1, (2 * H, H), dtype=jnp.float32),
        scale * jax.random.normal(k_b1, (H,), dtype=jnp.float32),
        scale * jax.random.normal(k_w2, (H, H), dtype=jnp.float32),
        scale * jax.random.normal(k_b2, (H,), dtype=jnp.float32),
        scale * jax.random.normal(k_w3, (H, H), dtype=jnp.float32),
        scale * jax.random.normal(k_b3, (H,), dtype=jnp.float32),
    )

    out = node_model_forward(x, edge_index, edge_attr, params)
    out = jax.block_until_ready(out)

    ref = node_model_reference(x, edge_index, edge_attr, params)
    assert out.shape == (B, N, H)
    assert jnp.allclose(out, ref, atol=1e-4, rtol=1e-4), "mismatch vs JAX reference"

    print("KERNEL_OK")
</pallas_src>

<mosaic_0001>
module attributes {stable_mosaic.version = 11 : i64} {
  func.func @node_model_kernel(%arg0: i32, %arg1: i32, %arg2: memref<1x16x128xf32, #tpu.memory_space<vmem>>, %arg3: memref<1x24x128xf32, #tpu.memory_space<vmem>>, %arg4: memref<16x24xf32, #tpu.memory_space<vmem>>, %arg5: memref<128x128xf32, #tpu.memory_space<vmem>>, %arg6: memref<128x128xf32, #tpu.memory_space<vmem>>, %arg7: memref<1x128xf32, #tpu.memory_space<vmem>>, %arg8: memref<128x128xf32, #tpu.memory_space<vmem>>, %arg9: memref<1x128xf32, #tpu.memory_space<vmem>>, %arg10: memref<128x128xf32, #tpu.memory_space<vmem>>, %arg11: memref<1x128xf32, #tpu.memory_space<vmem>>, %arg12: memref<1x16x128xf32, #tpu.memory_space<vmem>>) attributes {dimension_semantics = [#tpu.dimension_semantics<parallel>, #tpu.dimension_semantics<parallel>], iteration_bounds = array<i64: 2, 1>, scalar_prefetch = 0 : i64, scratch_operands = 0 : i64, tpu.core_type = #tpu.core_type<tc>, window_params = [{transform_indices = @transform_0, window_bounds = array<i64: 1, 16, 128>}, {transform_indices = @transform_1, window_bounds = array<i64: 1, 24, 128>}, {transform_indices = @transform_2, window_bounds = array<i64: 16, 24>}, {pipeline_mode = #tpu.pipeline_mode<synchronous>, transform_indices = @transform_3, window_bounds = array<i64: 128, 128>}, {pipeline_mode = #tpu.pipeline_mode<synchronous>, transform_indices = @transform_4, window_bounds = array<i64: 128, 128>}, {pipeline_mode = #tpu.pipeline_mode<synchronous>, transform_indices = @transform_5, window_bounds = array<i64: 1, 128>}, {pipeline_mode = #tpu.pipeline_mode<synchronous>, transform_indices = @transform_6, window_bounds = array<i64: 128, 128>}, {pipeline_mode = #tpu.pipeline_mode<synchronous>, transform_indices = @transform_7, window_bounds = array<i64: 1, 128>}, {pipeline_mode = #tpu.pipeline_mode<synchronous>, transform_indices = @transform_8, window_bounds = array<i64: 128, 128>}, {pipeline_mode = #tpu.pipeline_mode<synchronous>, transform_indices = @transform_9, window_bounds = array<i64: 1, 128>}, {transform_indices = @transform_10, window_bounds = array<i64: 1, 16, 128>}]} {
    %c0 = arith.constant 0 : index
    %c0_0 = arith.constant 0 : index
    %c0_1 = arith.constant 0 : index
    %0 = vector.load %arg2[%c0, %c0_0, %c0_1] : memref<1x16x128xf32, #tpu.memory_space<vmem>>, vector<1x16x128xf32>
    %1 = vector.shape_cast %0 : vector<1x16x128xf32> to vector<16x128xf32>
    %c0_2 = arith.constant 0 : index
    %c0_3 = arith.constant 0 : index
    %c0_4 = arith.constant 0 : index
    %2 = vector.load %arg3[%c0_2, %c0_3, %c0_4] : memref<1x24x128xf32, #tpu.memory_space<vmem>>, vector<1x24x128xf32>
    %3 = vector.shape_cast %2 : vector<1x24x128xf32> to vector<24x128xf32>
    %c0_5 = arith.constant 0 : index
    %c0_6 = arith.constant 0 : index
    %4 = vector.load %arg4[%c0_5, %c0_6] : memref<16x24xf32, #tpu.memory_space<vmem>>, vector<16x24xf32>
    %cst = arith.constant dense<0.000000e+00> : vector<16x128xf32>
    %5 = tpu.matmul %4, %3, %cst {dimension_numbers = #tpu.dot_dimension_numbers<[1], [0], [0], [1], [0, 0, 1, 1], [], []>} : vector<16x24xf32>, vector<24x128xf32>, vector<16x128xf32> -> vector<16x128xf32>
    %c0_7 = arith.constant 0 : index
    %c0_8 = arith.constant 0 : index
    %6 = vector.load %arg5[%c0_7, %c0_8] : memref<128x128xf32, #tpu.memory_space<vmem>>, vector<128x128xf32>
    %cst_9 = arith.constant dense<0.000000e+00> : vector<16x128xf32>
    %7 = tpu.matmul %1, %6, %cst_9 {dimension_numbers = #tpu.dot_dimension_numbers<[1], [0], [0], [1], [0, 0, 1, 1], [], []>} : vector<16x128xf32>, vector<128x128xf32>, vector<16x128xf32> -> vector<16x128xf32>
    %c0_10 = arith.constant 0 : index
    %c0_11 = arith.constant 0 : index
    %8 = vector.load %arg6[%c0_10, %c0_11] : memref<128x128xf32, #tpu.memory_space<vmem>>, vector<128x128xf32>
    %cst_12 = arith.constant dense<0.000000e+00> : vector<16x128xf32>
    %9 = tpu.matmul %5, %8, %cst_12 {dimension_numbers = #tpu.dot_dimension_numbers<[1], [0], [0], [1], [0, 0, 1, 1], [], []>} : vector<16x128xf32>, vector<128x128xf32>, vector<16x128xf32> -> vector<16x128xf32>
    %10 = arith.addf %7, %9 : vector<16x128xf32>
    %c0_13 = arith.constant 0 : index
    %c0_14 = arith.constant 0 : index
    %11 = vector.load %arg7[%c0_13, %c0_14] : memref<1x128xf32, #tpu.memory_space<vmem>>, vector<1x128xf32>
    %12 = vector.broadcast %11 : vector<1x128xf32> to vector<16x128xf32>
    %13 = arith.addf %10, %12 : vector<16x128xf32>
    %14 = arith.negf %13 : vector<16x128xf32>
    %15 = math.exp %14 : vector<16x128xf32>
    %cst_15 = arith.constant 1.000000e+00 : f32
    %16 = vector.broadcast %cst_15 : f32 to vector<16x128xf32>
    %17 = arith.addf %16, %15 : vector<16x128xf32>
    %18 = arith.divf %16, %17 : vector<16x128xf32>
    %19 = arith.mulf %13, %18 : vector<16x128xf32>
    %c0_16 = arith.constant 0 : index
    %c0_17 = arith.constant 0 : index
    %20 = vector.load %arg8[%c0_16, %c0_17] : memref<128x128xf32, #tpu.memory_space<vmem>>, vector<128x128xf32>
    %cst_18 = arith.constant dense<0.000000e+00> : vector<16x128xf32>
    %21 = tpu.matmul %19, %20, %cst_18 {dimension_numbers = #tpu.dot_dimension_numbers<[1], [0], [0], [1], [0, 0, 1, 1], [], []>} : vector<16x128xf32>, vector<128x128xf32>, vector<16x128xf32> -> vector<16x128xf32>
    %c0_19 = arith.constant 0 : index
    %c0_20 = arith.constant 0 : index
    %22 = vector.load %arg9[%c0_19, %c0_20] : memref<1x128xf32, #tpu.memory_space<vmem>>, vector<1x128xf32>
    %23 = vector.broadcast %22 : vector<1x128xf32> to vector<16x128xf32>
    %24 = arith.addf %21, %23 : vector<16x128xf32>
    %25 = arith.negf %24 : vector<16x128xf32>
    %26 = math.exp %25 : vector<16x128xf32>
    %cst_21 = arith.constant 1.000000e+00 : f32
    %27 = vector.broadcast %cst_21 : f32 to vector<16x128xf32>
    %28 = arith.addf %27, %26 : vector<16x128xf32>
    %29 = arith.divf %27, %28 : vector<16x128xf32>
    %30 = arith.mulf %24, %29 : vector<16x128xf32>
    %c0_22 = arith.constant 0 : index
    %c0_23 = arith.constant 0 : index
    %31 = vector.load %arg10[%c0_22, %c0_23] : memref<128x128xf32, #tpu.memory_space<vmem>>, vector<128x128xf32>
    %cst_24 = arith.constant dense<0.000000e+00> : vector<16x128xf32>
    %32 = tpu.matmul %30, %31, %cst_24 {dimension_numbers = #tpu.dot_dimension_numbers<[1], [0], [0], [1], [0, 0, 1, 1], [], []>} : vector<16x128xf32>, vector<128x128xf32>, vector<16x128xf32> -> vector<16x128xf32>
    %c0_25 = arith.constant 0 : index
    %c0_26 = arith.constant 0 : index
    %33 = vector.load %arg11[%c0_25, %c0_26] : memref<1x128xf32, #tpu.memory_space<vmem>>, vector<1x128xf32>
    %34 = vector.broadcast %33 : vector<1x128xf32> to vector<16x128xf32>
    %35 = arith.addf %32, %34 : vector<16x128xf32>
    %c0_27 = arith.constant 0 : index
    %c0_28 = arith.constant 0 : index
    %c0_29 = arith.constant 0 : index
    %36 = vector.load %arg12[%c0_27, %c0_28, %c0_29] : memref<1x16x128xf32, #tpu.memory_space<vmem>>, vector<1x16x128xf32>
    %37 = vector.shape_cast %36 : vector<1x16x128xf32> to vector<16x128xf32>
    %38 = vector.shape_cast %35 : vector<16x128xf32> to vector<1x16x128xf32>
    tpu.vector_store %arg12[%c0_27, %c0_28, %c0_29], %38 {strides = array<i32>} : memref<1x16x128xf32, #tpu.memory_space<vmem>>, vector<1x16x128xf32>,
    return
  }
  func.func @transform_0(%arg0: i32, %arg1: i32) -> (i32, i32, i32) {
    %c0_i32 = arith.constant 0 : i32
    %c0_i32_0 = arith.constant 0 : i32
    return %arg0, %arg1, %c0_i32 : i32, i32, i32
  }
  func.func @transform_1(%arg0: i32, %arg1: i32) -> (i32, i32, i32) {
    %c0_i32 = arith.constant 0 : i32
    %c0_i32_0 = arith.constant 0 : i32
    %c0_i32_1 = arith.constant 0 : i32
    return %arg0, %c0_i32, %c0_i32_0 : i32, i32, i32
  }
  func.func @transform_2(%arg0: i32, %arg1: i32) -> (i32, i32) {
    %c0_i32 = arith.constant 0 : i32
    %c0_i32_0 = arith.constant 0 : i32
    return %arg1, %c0_i32 : i32, i32
  }
  func.func @transform_3(%arg0: i32, %arg1: i32) -> (i32, i32) {
    %c0_i32 = arith.constant 0 : i32
    %c0_i32_0 = arith.constant 0 : i32
    %c0_i32_1 = arith.constant 0 : i32
    return %c0_i32, %c0_i32_0 : i32, i32
  }
  func.func @transform_4(%arg0: i32, %arg1: i32) -> (i32, i32) {
    %c0_i32 = arith.constant 0 : i32
    %c0_i32_0 = arith.constant 0 : i32
    %c0_i32_1 = arith.constant 0 : i32
    return %c0_i32, %c0_i32_0 : i32, i32
  }
  func.func @transform_5(%arg0: i32, %arg1: i32) -> (i32, i32) {
    %c0_i32 = arith.constant 0 : i32
    %c0_i32_0 = arith.constant 0 : i32
    %c0_i32_1 = arith.constant 0 : i32
    return %c0_i32, %c0_i32_0 : i32, i32
  }
  func.func @transform_6(%arg0: i32, %arg1: i32) -> (i32, i32) {
    %c0_i32 = arith.constant 0 : i32
    %c0_i32_0 = arith.constant 0 : i32
    %c0_i32_1 = arith.constant 0 : i32
    return %c0_i32, %c0_i32_0 : i32, i32
  }
  func.func @transform_7(%arg0: i32, %arg1: i32) -> (i32, i32) {
    %c0_i32 = arith.constant 0 : i32
    %c0_i32_0 = arith.constant 0 : i32
    %c0_i32_1 = arith.constant 0 : i32
    return %c0_i32, %c0_i32_0 : i32, i32
  }
  func.func @transform_8(%arg0: i32, %arg1: i32) -> (i32, i32) {
    %c0_i32 = arith.constant 0 : i32
    %c0_i32_0 = arith.constant 0 : i32
    %c0_i32_1 = arith.constant 0 : i32
    return %c0_i32, %c0_i32_0 : i32, i32
  }
  func.func @transform_9(%arg0: i32, %arg1: i32) -> (i32, i32) {
    %c0_i32 = arith.constant 0 : i32
    %c0_i32_0 = arith.constant 0 : i32
    %c0_i32_1 = arith.constant 0 : i32
    return %c0_i32, %c0_i32_0 : i32, i32
  }
  func.func @transform_10(%arg0: i32, %arg1: i32) -> (i32, i32, i32) {
    %c0_i32 = arith.constant 0 : i32
    %c0_i32_0 = arith.constant 0 : i32
    return %arg0, %arg1, %c0_i32 : i32, i32, i32
  }
}

</mosaic_0001>

<llo_original>
// kernel: node_model_forward.1
$region0: #{node_model_forward.1}
  #allocation0 [shape = 'u32[]', space=smem, size = 0x4, offset = 0x4, fixed_abs, tag = 'smem constant byte address 0x4 - core index']
  #allocation1 [shape = 'u32[144,128]{1,0:T(1,128)}', space=vmem, size = 0x12000, scoped, tag = 'internal scratch']
  %s0 = inlined_call_operand.vmem [shape: f32[2,16,128], index: 0, kind: input, shape index: {}]
  %s1 = inlined_call_operand.vmem [shape: f32[2,24,128], index: 1, kind: input, shape index: {}]
  %s2 = inlined_call_operand.vmem [shape: f32[16,24], index: 2, kind: input, shape index: {}]
  %s3 = inlined_call_operand.vmem [shape: f32[128,128], index: 3, kind: input, shape index: {}]
  %s4 = inlined_call_operand.vmem [shape: f32[128,128], index: 4, kind: input, shape index: {}]
  %s5 = inlined_call_operand.vmem [shape: f32[1,128], index: 5, kind: input, shape index: {}]
  %s6 = inlined_call_operand.vmem [shape: f32[128,128], index: 6, kind: input, shape index: {}]
  %s7 = inlined_call_operand.vmem [shape: f32[1,128], index: 7, kind: input, shape index: {}]
  %s8 = inlined_call_operand.vmem [shape: f32[128,128], index: 8, kind: input, shape index: {}]
  %s9 = inlined_call_operand.vmem [shape: f32[1,128], index: 9, kind: input, shape index: {}]
  %s10 = inlined_call_operand.hbm [shape: f32[2,16,128], index: 10, kind: output, shape index: {}]
  %s11 = sld [smem:[#allocation0]]
  $region73: #{node_model_forward.1} parent=0
    _
  %s13 = ssub.s32 1, %s11
  %s14 = scalar_select 0, %s13, %s11
  $region1: #{node_model_forward.1} parent=0
    #allocation2 [shape = 'u8[16384]{0}', space=vmem, size = 0x4000, scoped, tag = 'output window, operand 0']
    #allocation3 [shape = 's32[2]{0}', space=sflag, size = 0x8, scoped, tag = 'scoped memory for node_model_forward.1']
    %15 = vsyncpa [#allocation3], 0
    %s16 = scalar_lea.sflag [#allocation3], 1
    %17 = vsyncpa %s16, 0
    loop: start=0, step=1, limit=4
    $region2: #{node_model_forward.1} parent=1 // loop_pre_header
      _
    $region3: #{node_model_forward.1} parent=1 // loop_header
      %s19 = sphi 0, %s23
      %p20 = scmp.ge.s32.totalorder %s19, 4
      %s26 = sphi 0, %s38
      %s27 = sphi 0, %s34
      %s28 = sphi 0, %s26
      %s29 = sphi 0, %s27
      %s30 = sphi 0, %s28
      %s31 = sphi 0, %s29
      %s43 = sphi 0, %s45
      %s46 = sphi 0, %s43
      %s47 = sphi 0, %s46
      %s63 = sphi 0, %s47
      %s69 = sphi 0, %s71
      %s72 = sphi 0, %s69
      %s73 = sphi 0, %s72
      %s89 = sphi 0, %s73
      %s95 = sphi 0, %s97
      %s98 = sphi 0, %s95
      %s99 = sphi 0, %s98
      %s115 = sphi 0, %s99
      %s119 = sphi 0, %s119
      %s121 = sphi 0, %s119
      %s122 = sphi 0, %s121
      %s136 = sphi 0, %s122
      %s140 = sphi 0, %s140
      %s142 = sphi 0, %s140
      %s143 = sphi 0, %s142
      %s157 = sphi 0, %s143
      %s161 = sphi 0, %s161
      %s163 = sphi 0, %s161
      %s164 = sphi 0, %s163
      %s178 = sphi 0, %s164
      %s182 = sphi 0, %s182
      %s184 = sphi 0, %s182
      %s185 = sphi 0, %s184
      %s199 = sphi 0, %s185
      %s203 = sphi 0, %s203
      %s205 = sphi 0, %s203
      %s206 = sphi 0, %s205
      %s220 = sphi 0, %s206
      %s224 = sphi 0, %s224
      %s226 = sphi 0, %s224
      %s227 = sphi 0, %s226
      %s241 = sphi 0, %s227
      %s245 = sphi 0, %s245
      %s247 = sphi 0, %s245
      %s248 = sphi 0, %s247
      %s262 = sphi 0, %s248
      %s270 = sphi 0, %s272
      %s273 = sphi 0, %s270
      %s274 = sphi 0, %s273
      %s290 = sphi 0, %s274
    $region4: #{node_model_forward.1} parent=1 // loop_header_branch
      %22 = sbr.rel (%p20) target = $region8
    $region5: #{node_model_forward.1} parent=1 // loop_body
      %s24 = ssub.s32 %s19, 1
      %s25 = ssub.s32 %s19, 2
      %s32 = sadd.s32 1, %s27
      %p33 = scmp.ge.s32.totalorder %s32, 1
      %s34 = scalar_select %p33, 0, %s32
      %s35 = sadd.s32 1, %s26
      %s36 = scalar_select %p33, %s35, %s26
      %p37 = scmp.ge.s32.totalorder %s36, 2
      %s38 = scalar_select %p37, 0, %s36
      %s39 = ssub.s32 %s26, %s38
      %s40 = ssub.s32 %s27, %s34
      %s41 = sor.u32 %s39, %s40
      %p42 = scmp.eq.s32.totalorder %s41, 0
      %s44 = sadd.s32 %s43, 1
      %s45 = scalar_select %p42, %s43, %s44
      %p48 = pneg %p42
      %p49 = scmp.eq.s32.totalorder %s19, 1
      %p50 = por %p48, %p49
      %p51 = scmp.ne.s32.totalorder %s43, %s46
      %p52 = scmp.eq.s32.totalorder %s19, 0
      %p53 = por %p51, %p52
      %p54 = scmp.ne.s32.totalorder %s43, %s46
      %p55 = scmp.eq.s32.totalorder %s24, 1
      %p56 = por %p54, %p55
      %p57 = scmp.ne.s32.totalorder %s46, %s47
      %p58 = scmp.eq.s32.totalorder %s24, 0
      %p59 = por %p57, %p58
      %p60 = scmp.ne.s32.totalorder %s46, %s47
      %p61 = scmp.eq.s32.totalorder %s25, 1
      %p62 = por %p60, %p61
      %p64 = scmp.ne.s32.totalorder %s47, %s63
      %p65 = scmp.eq.s32.totalorder %s25, 0
      %p66 = por %p64, %p65
      %s67 = ssub.s32 %s26, %s38
      %p68 = scmp.eq.s32.totalorder %s67, 0
      %s70 = sadd.s32 %s69, 1
      %s71 = scalar_select %p68, %s69, %s70
      %p74 = pneg %p68
      %p75 = scmp.eq.s32.totalorder %s19, 1
      %p76 = por %p74, %p75
      %p77 = scmp.ne.s32.totalorder %s69, %s72
      %p78 = scmp.eq.s32.totalorder %s19, 0
      %p79 = por %p77, %p78
      %p80 = scmp.ne.s32.totalorder %s69, %s72
      %p81 = scmp.eq.s32.totalorder %s24, 1
      %p82 = por %p80, %p81
      %p83 = scmp.ne.s32.totalorder %s72, %s73
      %p84 = scmp.eq.s32.totalorder %s24, 0
      %p85 = por %p83, %p84
      %p86 = scmp.ne.s32.totalorder %s72, %s73
      %p87 = scmp.eq.s32.totalorder %s25, 1
      %p88 = por %p86, %p87
      %p90 = scmp.ne.s32.totalorder %s73, %s89
      %p91 = scmp.eq.s32.totalorder %s25, 0
      %p92 = por %p90, %p91
      %s93 = ssub.s32 %s27, %s34
      %p94 = scmp.eq.s32.totalorder %s93, 0
      %s96 = sadd.s32 %s95, 1
      %s97 = scalar_select %p94, %s95, %s96
      %p100 = pneg %p94
      %p101 = scmp.eq.s32.totalorder %s19, 1
      %p102 = por %p100, %p101
      %p103 = scmp.ne.s32.totalorder %s95, %s98
      %p104 = scmp.eq.s32.totalorder %s19, 0
      %p105 = por %p103, %p104
      %p106 = scmp.ne.s32.totalorder %s95, %s98
      %p107 = scmp.eq.s32.totalorder %s24, 1
      %p108 = por %p106, %p107
      %p109 = scmp.ne.s32.totalorder %s98, %s99
      %p110 = scmp.eq.s32.totalorder %s24, 0
      %p111 = por %p109, %p110
      %p112 = scmp.ne.s32.totalorder %s98, %s99
      %p113 = scmp.eq.s32.totalorder %s25, 1
      %p114 = por %p112, %p113
      %p116 = scmp.ne.s32.totalorder %s99, %s115
      %p117 = scmp.eq.s32.totalorder %s25, 0
      %p118 = por %p116, %p117
      %s120 = sadd.s32 %s119, 1
      %p123 = scmp.eq.s32.totalorder %s19, 1
      %p124 = scmp.ne.s32.totalorder %s119, %s121
      %p125 = scmp.eq.s32.totalorder %s19, 0
      %p126 = por %p124, %p125
      %p127 = scmp.ne.s32.totalorder %s119, %s121
      %p128 = scmp.eq.s32.totalorder %s24, 1
      %p129 = por %p127, %p128
      %p130 = scmp.ne.s32.totalorder %s121, %s122
      %p131 = scmp.eq.s32.totalorder %s24, 0
      %p132 = por %p130, %p131
      %p133 = scmp.ne.s32.totalorder %s121, %s122
      %p134 = scmp.eq.s32.totalorder %s25, 1
      %p135 = por %p133, %p134
      %p137 = scmp.ne.s32.totalorder %s122, %s136
      %p138 = scmp.eq.s32.totalorder %s25, 0
      %p139 = por %p137, %p138
      %s141 = sadd.s32 %s140, 1
      %p144 = scmp.eq.s32.totalorder %s19, 1
      %p145 = scmp.ne.s32.totalorder %s140, %s142
      %p146 = scmp.eq.s32.totalorder %s19, 0
      %p147 = por %p145, %p146
      %p148 = scmp.ne.s32.totalorder %s140, %s142
      %p149 = scmp.eq.s32.totalorder %s24, 1
      %p150 = por %p148, %p149
      %p151 = scmp.ne.s32.totalorder %s142, %s143
      %p152 = scmp.eq.s32.totalorder %s24, 0
      %p153 = por %p151, %p152
      %p154 = scmp.ne.s32.totalorder %s142, %s143
      %p155 = scmp.eq.s32.totalorder %s25, 1
      %p156 = por %p154, %p155
      %p158 = scmp.ne.s32.totalorder %s143, %s157
      %p159 = scmp.eq.s32.totalorder %s25, 0
      %p160 = por %p158, %p159
      %s162 = sadd.s32 %s161, 1
      %p165 = scmp.eq.s32.totalorder %s19, 1
      %p166 = scmp.ne.s32.totalorder %s161, %s163
      %p167 = scmp.eq.s32.totalorder %s19, 0
      %p168 = por %p166, %p167
      %p169 = scmp.ne.s32.totalorder %s161, %s163
      %p170 = scmp.eq.s32.totalorder %s24, 1
      %p171 = por %p169, %p170
      %p172 = scmp.ne.s32.totalorder %s163, %s164
      %p173 = scmp.eq.s32.totalorder %s24, 0
      %p174 = por %p172, %p173
      %p175 = scmp.ne.s32.totalorder %s163, %s164
      %p176 = scmp.eq.s32.totalorder %s25, 1
      %p177 = por %p175, %p176
      %p179 = scmp.ne.s32.totalorder %s164, %s178
      %p180 = scmp.eq.s32.totalorder %s25, 0
      %p181 = por %p179, %p180
      %s183 = sadd.s32 %s182, 1
      %p186 = scmp.eq.s32.totalorder %s19, 1
      %p187 = scmp.ne.s32.totalorder %s182, %s184
      %p188 = scmp.eq.s32.totalorder %s19, 0
      %p189 = por %p187, %p188
      %p190 = scmp.ne.s32.totalorder %s182, %s184
      %p191 = scmp.eq.s32.totalorder %s24, 1
      %p192 = por %p190, %p191
      %p193 = scmp.ne.s32.totalorder %s184, %s185
      %p194 = scmp.eq.s32.totalorder %s24, 0
      %p195 = por %p193, %p194
      %p196 = scmp.ne.s32.totalorder %s184, %s185
      %p197 = scmp.eq.s32.totalorder %s25, 1
      %p198 = por %p196, %p197
      %p200 = scmp.ne.s32.totalorder %s185, %s199
      %p201 = scmp.eq.s32.totalorder %s25, 0
      %p202 = por %p200, %p201
      %s204 = sadd.s32 %s203, 1
      %p207 = scmp.eq.s32.totalorder %s19, 1
      %p208 = scmp.ne.s32.totalorder %s203, %s205
      %p209 = scmp.eq.s32.totalorder %s19, 0
      %p210 = por %p208, %p209
      %p211 = scmp.ne.s32.totalorder %s203, %s205
      %p212 = scmp.eq.s32.totalorder %s24, 1
      %p213 = por %p211, %p212
      %p214 = scmp.ne.s32.totalorder %s205, %s206
      %p215 = scmp.eq.s32.totalorder %s24, 0
      %p216 = por %p214, %p215
      %p217 = scmp.ne.s32.totalorder %s205, %s206
      %p218 = scmp.eq.s32.totalorder %s25, 1
      %p219 = por %p217, %p218
      %p221 = scmp.ne.s32.totalorder %s206, %s220
      %p222 = scmp.eq.s32.totalorder %s25, 0
      %p223 = por %p221, %p222
      %s225 = sadd.s32 %s224, 1
      %p228 = scmp.eq.s32.totalorder %s19, 1
      %p229 = scmp.ne.s32.totalorder %s224, %s226
      %p230 = scmp.eq.s32.totalorder %s19, 0
      %p231 = por %p229, %p230
      %p232 = scmp.ne.s32.totalorder %s224, %s226
      %p233 = scmp.eq.s32.totalorder %s24, 1
      %p234 = por %p232, %p233
      %p235 = scmp.ne.s32.totalorder %s226, %s227
      %p236 = scmp.eq.s32.totalorder %s24, 0
      %p237 = por %p235, %p236
      %p238 = scmp.ne.s32.totalorder %s226, %s227
      %p239 = scmp.eq.s32.totalorder %s25, 1
      %p240 = por %p238, %p239
      %p242 = scmp.ne.s32.totalorder %s227, %s241
      %p243 = scmp.eq.s32.totalorder %s25, 0
      %p244 = por %p242, %p243
      %s246 = sadd.s32 %s245, 1
      %p249 = scmp.eq.s32.totalorder %s19, 1
      %p250 = scmp.ne.s32.totalorder %s245, %s247
      %p251 = scmp.eq.s32.totalorder %s19, 0
      %p252 = por %p250, %p251
      %p253 = scmp.ne.s32.totalorder %s245, %s247
      %p254 = scmp.eq.s32.totalorder %s24, 1
      %p255 = por %p253, %p254
      %p256 = scmp.ne.s32.totalorder %s247, %s248
      %p257 = scmp.eq.s32.totalorder %s24, 0
      %p258 = por %p256, %p257
      %p259 = scmp.ne.s32.totalorder %s247, %s248
      %p260 = scmp.eq.s32.totalorder %s25, 1
      %p261 = por %p259, %p260
      %p263 = scmp.ne.s32.totalorder %s248, %s262
      %p264 = scmp.eq.s32.totalorder %s25, 0
      %p265 = por %p263, %p264
      %s266 = ssub.s32 %s26, %s38
      %s267 = ssub.s32 %s27, %s34
      %s268 = sor.u32 %s266, %s267
      %p269 = scmp.eq.s32.totalorder %s268, 0
      %s271 = sadd.s32 %s270, 1
      %s272 = scalar_select %p269, %s270, %s271
      %p275 = pneg %p269
      %p276 = scmp.eq.s32.totalorder %s19, 1
      %p277 = por %p275, %p276
      %p278 = scmp.ne.s32.totalorder %s270, %s273
      %p279 = scmp.eq.s32.totalorder %s19, 0
      %p280 = por %p278, %p279
      %p281 = scmp.ne.s32.totalorder %s270, %s273
      %p282 = scmp.eq.s32.totalorder %s24, 1
      %p283 = por %p281, %p282
      %p284 = scmp.ne.s32.totalorder %s273, %s274
      %p285 = scmp.eq.s32.totalorder %s24, 0
      %p286 = por %p284, %p285
      %p287 = scmp.ne.s32.totalorder %s273, %s274
      %p288 = scmp.eq.s32.totalorder %s25, 1
      %p289 = por %p287, %p288
      %p291 = scmp.ne.s32.totalorder %s274, %s290
      %p292 = scmp.eq.s32.totalorder %s25, 0
      %p293 = por %p291, %p292
      %p294 = scmp.le.s32.totalorder 1, %s19
      %p295 = scmp.lt.s32.totalorder %s19, 3
      %p296 = pnand %p294, %p295
      %p297 = pneg %p296
      // Predicated region
      $region9: #{node_model_forward.1} parent=5 // pred_check
        _
      $region10: #{node_model_forward.1} parent=5 // pred_check_branch
        %299 = sbr.rel (%p296) target = $region12
      $region11: #{node_model_forward.1} parent=5 // pred_region
        %s300 = ssub.s32 %s19, 1
        // Predicated region
        $region13: #{node_model_forward.1} parent=11 // pred_check
          %p301 = pneg %p111
        $region14: #{node_model_forward.1} parent=11 // pred_check_branch
          %303 = sbr.rel (%p301) target = $region16
        $region15: #{node_model_forward.1} parent=11 // pred_region
          %s304 = smul.u32 2, %s29
          %p305 = scmp.lt.s32.totalorder %s304, 1
          %s306 = scalar_select %p305, %s304, 1
          %s307 = smul.addr %s306, 8
          %s308 = scalar_lea.vmem %s2, %s307
          %s309 = smul.u32 2, %s29
        $region16: #{node_model_forward.1} parent=11 // pred_fallthru
          _
        // Predicated region
        $region17: #{node_model_forward.1} parent=11 // pred_check
          %p310 = pneg %p132
        $region18: #{node_model_forward.1} parent=11 // pred_check_branch
          %312 = sbr.rel (%p310) target = $region20
        $region19: #{node_model_forward.1} parent=11 // pred_region
          _
        $region20: #{node_model_forward.1} parent=11 // pred_fallthru
          _
        // Predicated region
        $region21: #{node_model_forward.1} parent=11 // pred_check
          %p313 = pneg %p153
        $region22: #{node_model_forward.1} parent=11 // pred_check_branch
          %315 = sbr.rel (%p313) target = $region24
        $region23: #{node_model_forward.1} parent=11 // pred_region
          _
        $region24: #{node_model_forward.1} parent=11 // pred_fallthru
          _
        // Predicated region
        $region25: #{node_model_forward.1} parent=11 // pred_check
          %p316 = pneg %p174
        $region26: #{node_model_forward.1} parent=11 // pred_check_branch
          %318 = sbr.rel (%p316) target = $region28
        $region27: #{node_model_forward.1} parent=11 // pred_region
          _
        $region28: #{node_model_forward.1} parent=11 // pred_fallthru
          _
        // Predicated region
        $region29: #{node_model_forward.1} parent=11 // pred_check
          %p319 = pneg %p195
        $region30: #{node_model_forward.1} parent=11 // pred_check_branch
          %321 = sbr.rel (%p319) target = $region32
        $region31: #{node_model_forward.1} parent=11 // pred_region
          _
        $region32: #{node_model_forward.1} parent=11 // pred_fallthru
          _
        // Predicated region
        $region33: #{node_model_forward.1} parent=11 // pred_check
          %p322 = pneg %p216
        $region34: #{node_model_forward.1} parent=11 // pred_check_branch
          %324 = sbr.rel (%p322) target = $region36
        $region35: #{node_model_forward.1} parent=11 // pred_region
          _
        $region36: #{node_model_forward.1} parent=11 // pred_fallthru
          _
        // Predicated region
        $region37: #{node_model_forward.1} parent=11 // pred_check
          %p325 = pneg %p237
        $region38: #{node_model_forward.1} parent=11 // pred_check_branch
          %327 = sbr.rel (%p325) target = $region40
        $region39: #{node_model_forward.1} parent=11 // pred_region
          _
        $region40: #{node_model_forward.1} parent=11 // pred_fallthru
          _
        // Predicated region
        $region41: #{node_model_forward.1} parent=11 // pred_check
          %p328 = pneg %p258
        $region42: #{node_model_forward.1} parent=11 // pred_check_branch
          %330 = sbr.rel (%p328) target = $region44
        $region43: #{node_model_forward.1} parent=11 // pred_region
          _
        $region44: #{node_model_forward.1} parent=11 // pred_fallthru
          _
      $region12: #{node_model_forward.1} parent=5 // pred_fallthru
        _
      %p331 = scmp.lt.s32.totalorder %s19, 2
      // Predicated region
      $region45: #{node_model_forward.1} parent=5 // pred_check
        %p332 = pneg %p331
      $region46: #{node_model_forward.1} parent=5 // pred_check_branch
        %334 = sbr.rel (%p332) target = $region48
      $region47: #{node_model_forward.1} parent=5 // pred_region
        // Predicated region
        $region49: #{node_model_forward.1} parent=47 // pred_check
          %p335 = pneg %p53
        $region50: #{node_model_forward.1} parent=47 // pred_check_branch
          %337 = sbr.rel (%p335) target = $region52
        $region51: #{node_model_forward.1} parent=47 // pred_region
          %s338 = smul.u32 2, %s27
          %p339 = scmp.lt.s32.totalorder %s26, 1
          %s340 = scalar_select %p339, %s26, 1
          %p341 = scmp.lt.s32.totalorder %s338, 1
          %s342 = scalar_select %p341, %s338, 1
          %s343 = smul.addr %s340, 2
          %s344 = sadd.s32 %s342, %s343
          %s345 = smul.addr %s344, 8
          %s346 = scalar_lea.vmem %s0, %s345
          %s347 = smul.u32 2, %s27
        $region52: #{node_model_forward.1} parent=47 // pred_fallthru
          _
        // Predicated region
        $region53: #{node_model_forward.1} parent=47 // pred_check
          %p348 = pneg %p79
        $region54: #{node_model_forward.1} parent=47 // pred_check_branch
          %350 = sbr.rel (%p348) target = $region56
        $region55: #{node_model_forward.1} parent=47 // pred_region
          %p351 = scmp.lt.s32.totalorder %s26, 1
          %s352 = scalar_select %p351, %s26, 1
          %s353 = smul.addr %s352, 3
          %s354 = smul.addr %s353, 8
          %s355 = scalar_lea.vmem %s1, %s354
        $region56: #{node_model_forward.1} parent=47 // pred_fallthru
          _
      $region48: #{node_model_forward.1} parent=5 // pred_fallthru
        _
      %p356 = scmp.le.s32.totalorder 1, %s19
      %p357 = scmp.lt.s32.totalorder %s19, 3
      %p358 = pnand %p356, %p357
      %p359 = pneg %p358
      // Predicated region
      $region57: #{node_model_forward.1} parent=5 // pred_check
        _
      $region58: #{node_model_forward.1} parent=5 // pred_check_branch
        %361 = sbr.rel (%p358) target = $region60
      $region59: #{node_model_forward.1} parent=5 // pred_region
        %s362 = ssub.s32 %s19, 1
        %s363 = smul.u32 2, %s29
        %p364 = scmp.lt.s32.totalorder %s28, 1
        %s365 = scalar_select %p364, %s28, 1
        %p366 = scmp.lt.s32.totalorder %s363, 1
        %s367 = scalar_select %p366, %s363, 1
        %s368 = smul.addr %s365, 2
        %s369 = sadd.s32 %s367, %s368
        %s370 = smul.addr %s369, 8
        %s371 = scalar_lea.vmem %s0, %s370
        %p372 = pneg %p59
        %p373 = pneg %p56
        %p374 = scmp.lt.s32.totalorder %s28, 1
        %s375 = scalar_select %p374, %s28, 1
        %s376 = smul.addr %s375, 3
        %s377 = smul.addr %s376, 8
        %s378 = scalar_lea.vmem %s1, %s377
        %p379 = pneg %p85
        %p380 = pneg %p82
        %s381 = smul.u32 2, %s29
        %p382 = scmp.lt.s32.totalorder %s381, 1
        %s383 = scalar_select %p382, %s381, 1
        %s384 = smul.addr %s383, 8
        %s385 = scalar_lea.vmem %s2, %s384
        %p386 = pneg %p111
        %p387 = pneg %p108
        %p388 = pneg %p132
        %p389 = pneg %p129
        %p390 = pneg %p153
        %p391 = pneg %p150
        %p392 = pneg %p174
        %p393 = pneg %p171
        %p394 = pneg %p195
        %p395 = pneg %p192
        %p396 = pneg %p216
        %p397 = pneg %p213
        %p398 = pneg %p237
        %p399 = pneg %p234
        %p400 = pneg %p258
        %p401 = pneg %p255
        %p402 = pneg %p286
        %p403 = pneg %p283
        %s404 = sand.u32 %s273, 1
        %s405 = scalar_lea.sflag [#allocation3], %s404
        %s406 = sand.u32 %s273, 1
        %s407 = smul.addr %s406, 16
        %s408 = scalar_lea.vmem [#allocation2], %s407
        %s409 = smul.u32 2, %s29
        %p410 = scmp.lt.s32.totalorder %s28, 1
        %s411 = scalar_select %p410, %s28, 1
        %p412 = scmp.lt.s32.totalorder %s409, 1
        %s413 = scalar_select %p412, %s409, 1
        %s414 = smul.addr %s411, 2
        %s415 = sadd.s32 %s413, %s414
        %s416 = smul.addr %s415, 8
        %s417 = scalar_lea.vmem %s0, %s416
        %s418 = smul.u32 2, %s29
        %p419 = scmp.lt.s32.totalorder %s28, 1
        %s420 = scalar_select %p419, %s28, 1
        %s421 = smul.addr %s420, 3
        %s422 = smul.addr %s421, 8
        %s423 = scalar_lea.vmem %s1, %s422
        %s424 = smul.u32 2, %s29
        %p425 = scmp.lt.s32.totalorder %s424, 1
        %s426 = scalar_select %p425, %s424, 1
        %s427 = smul.addr %s426, 8
        %s428 = scalar_lea.vmem %s2, %s427
        %s429 = smul.u32 2, %s29
        %s430 = smul.u32 2, %s29
        %v431 = vld [vmem:[%s417] sm:$0xff]
        %v432 = vld [vmem:[%s417 + $0x8] sm:$0xff]
        %v433 = vld [vmem:[%s423] sm:$0xff]
        %v434 = vld [vmem:[%s423 + $0x8] sm:$0xff]
        %v435 = vld [vmem:[%s423 + $0x10] sm:$0xff]
        %v436 = vld [vmem:[%s428] sm:$0xff]
        %v437 = vld [vmem:[%s428 + $0x8] sm:$0xff]
        %vm438 = vcmask 195584
        %v440 = vsel %vm438, %v436, 0
        %v443 = vsel %vm438, %v437, 0
        %445 = vmatprep.subr.mxu0 0.0
        %446 = vmatpush1.msra.mxu0 0.0
        %447 = vmatprep.subr.mxu0 0.0
        %448 = vmatpush1.msra.mxu0 0.0
        %449 = vmatprep.subr.mxu0 0.0
        %450 = vmatpush1.msra.mxu0 0.0
        %451 = vmatprep.subr.mxu0 0.0
        %452 = vmatpush1.msra.mxu0 0.0
        %453 = vmatprep.subr.mxu0 0.0
        %454 = vmatpush1.msra.mxu0 0.0
        %455 = vmatprep.subr.mxu0 0.0
        %456 = vmatpush1.msra.mxu0 0.0
        %457 = vmatprep.subr.mxu0 0.0
        %458 = vmatpush1.msra.mxu0 0.0
        %459 = vmatprep.subr.mxu0 0.0
        %460 = vmatpush1.msra.mxu0 0.0
        %461 = vmatprep.subr.mxu0 0.0
        %462 = vmatpush1.msra.mxu0 0.0
        %463 = vmatprep.subr.mxu0 0.0
        %464 = vmatpush1.msra.mxu0 0.0
        %465 = vmatprep.subr.mxu0 0.0
        %466 = vmatpush1.msra.mxu0 0.0
        %467 = vmatprep.subr.mxu0 0.0
        %468 = vmatpush1.msra.mxu0 0.0
        %469 = vmatprep.subr.mxu0 0.0
        %470 = vmatpush1.msra.mxu0 0.0
        %471 = vmatprep.subr.mxu0 0.0
        %472 = vmatpush1.msra.mxu0 %v435
        %473 = vmatprep.subr.mxu0 0.0
        %474 = vmatpush1.msra.mxu0 %v434
        %475 = vmatprep.subr.mxu0 0.0
        %476 = vmatpush1.msra.mxu0 %v433
        %477 = vmatprep.subr.mxu0 0.0
        %478 = vmatpush2.msra.mxu0 0.0
        %479 = vmatprep.subr.mxu0 0.0
        %480 = vmatpush2.msra.mxu0 0.0
        %481 = vmatprep.subr.mxu0 0.0
        %482 = vmatpush2.msra.mxu0 0.0
        %483 = vmatprep.subr.mxu0 0.0
        %484 = vmatpush2.msra.mxu0 0.0
        %485 = vmatprep.subr.mxu0 0.0
        %486 = vmatpush2.msra.mxu0 0.0
        %487 = vmatprep.subr.mxu0 0.0
        %488 = vmatpush2.msra.mxu0 0.0
        %489 = vmatprep.subr.mxu0 0.0
        %490 = vmatpush2.msra.mxu0 0.0
        %491 = vmatprep.subr.mxu0 0.0
        %492 = vmatpush2.msra.mxu0 0.0
        %493 = vmatprep.subr.mxu0 0.0
        %494 = vmatpush2.msra.mxu0 0.0
        %495 = vmatprep.subr.mxu0 0.0
        %496 = vmatpush2.msra.mxu0 0.0
        %497 = vmatprep.subr.mxu0 0.0
        %498 = vmatpush2.msra.mxu0 0.0
        %499 = vmatprep.subr.mxu0 0.0
        %500 = vmatpush2.msra.mxu0 0.0
        %501 = vmatprep.subr.mxu0 0.0
        %502 = vmatpush2.msra.mxu0 0.0
        %503 = vmatprep.subr.mxu0 0.0
        %504 = vmatpush2.msra.mxu0 0.0
        %505 = vmatprep.subr.mxu0 0.0
        %506 = vmatpush2.msra.mxu0 0.0
        %507 = vmatprep.subr.mxu0 0.0
        %508 = vmatpush2.msra.mxu0 0.0
        %509 = vmatprep.mubr.f32.mxu0 0.0
        %510 = vmatmul.mubr.f32.gmra.mxu0 %v440
        %v511 = vpop.f32.mrf.mxu0
        %v512 = vadd.f32 0.0, %v511
        %v513 = vpop.f32.mrf.mxu0
        %514 = vmatprep.mubr.f32.mxu0 0.0
        %515 = vmatmul.mubr.f32.gmra.mxu0 %v443
        %v516 = vpop.f32.mrf.mxu0
        %v517 = vadd.f32 0.0, %v516
        %v518 = vpop.f32.mrf.mxu0
        %519 = vdwg.mxu0
        %v520 = vld [vmem:[%s3] sm:$0xff]
        %v521 = vld [vmem:[%s3 + $0x8] sm:$0xff]
        %v522 = vld [vmem:[%s3 + $0x10] sm:$0xff]
        %v523 = vld [vmem:[%s3 + $0x18] sm:$0xff]
        %v524 = vld [vmem:[%s3 + $0x20] sm:$0xff]
        %v525 = vld [vmem:[%s3 + $0x28] sm:$0xff]
        %v526 = vld [vmem:[%s3 + $0x30] sm:$0xff]
        %v527 = vld [vmem:[%s3 + $0x38] sm:$0xff]
        %v528 = vld [vmem:[%s3 + $0x40] sm:$0xff]
        %v529 = vld [vmem:[%s3 + $0x48] sm:$0xff]
        %v530 = vld [vmem:[%s3 + $0x50] sm:$0xff]
        %v531 = vld [vmem:[%s3 + $0x58] sm:$0xff]
        %v532 = vld [vmem:[%s3 + $0x60] sm:$0xff]
        %v533 = vld [vmem:[%s3 + $0x68] sm:$0xff]
        %v534 = vld [vmem:[%s3 + $0x70] sm:$0xff]
        %v535 = vld [vmem:[%s3 + $0x78] sm:$0xff]
        %v536 = vld [vmem:[%s4] sm:$0xff]
        %v537 = vld [vmem:[%s4 + $0x8] sm:$0xff]
        %v538 = vld [vmem:[%s4 + $0x10] sm:$0xff]
        %v539 = vld [vmem:[%s4 + $0x18] sm:$0xff]
        %v540 = vld [vmem:[%s4 + $0x20] sm:$0xff]
        %v541 = vld [vmem:[%s4 + $0x28] sm:$0xff]
        %v542 = vld [vmem:[%s4 + $0x30] sm:$0xff]
        %v543 = vld [vmem:[%s4 + $0x38] sm:$0xff]
        %v544 = vld [vmem:[%s4 + $0x40] sm:$0xff]
        %v545 = vld [vmem:[%s4 + $0x48] sm:$0xff]
        %v546 = vld [vmem:[%s4 + $0x50] sm:$0xff]
        %v547 = vld [vmem:[%s4 + $0x58] sm:$0xff]
        %v548 = vld [vmem:[%s4 + $0x60] sm:$0xff]
        %v549 = vld [vmem:[%s4 + $0x68] sm:$0xff]
        %v550 = vld [vmem:[%s4 + $0x70] sm:$0xff]
        %v551 = vld [vmem:[%s4 + $0x78] sm:$0xff]
        %552 = vmatprep.subr.mxu0 0.0
        %553 = vmatpush1.msra.mxu0 %v551
        %554 = vmatprep.subr.mxu0 0.0
        %555 = vmatpush1.msra.mxu0 %v550
        %556 = vmatprep.subr.mxu0 0.0
        %557 = vmatpush1.msra.mxu0 %v549
        %558 = vmatprep.subr.mxu0 0.0
        %559 = vmatpush1.msra.mxu0 %v548
        %560 = vmatprep.subr.mxu0 0.0
        %561 = vmatpush1.msra.mxu0 %v547
        %562 = vmatprep.subr.mxu0 0.0
        %563 = vmatpush1.msra.mxu0 %v546
        %564 = vmatprep.subr.mxu0 0.0
        %565 = vmatpush1.msra.mxu0 %v545
        %566 = vmatprep.subr.mxu0 0.0
        %567 = vmatpush1.msra.mxu0 %v544
        %568 = vmatprep.subr.mxu0 0.0
        %569 = vmatpush1.msra.mxu0 %v543
        %570 = vmatprep.subr.mxu0 0.0
        %571 = vmatpush1.msra.mxu0 %v542
        %572 = vmatprep.subr.mxu0 0.0
        %573 = vmatpush1.msra.mxu0 %v541
        %574 = vmatprep.subr.mxu0 0.0
        %575 = vmatpush1.msra.mxu0 %v540
        %576 = vmatprep.subr.mxu0 0.0
        %577 = vmatpush1.msra.mxu0 %v539
        %578 = vmatprep.subr.mxu0 0.0
        %579 = vmatpush1.msra.mxu0 %v538
        %580 = vmatprep.subr.mxu0 0.0
        %581 = vmatpush1.msra.mxu0 %v537
        %582 = vmatprep.subr.mxu0 0.0
        %583 = vmatpush1.msra.mxu0 %v536
        %584 = vmatprep.subr.mxu0 0.0
        %585 = vmatpush2.msra.mxu0 0.0
        %586 = vmatprep.subr.mxu0 0.0
        %587 = vmatpush2.msra.mxu0 0.0
        %588 = vmatprep.subr.mxu0 0.0
        %589 = vmatpush2.msra.mxu0 0.0
        %590 = vmatprep.subr.mxu0 0.0
        %591 = vmatpush2.msra.mxu0 0.0
        %592 = vmatprep.subr.mxu0 0.0
        %593 = vmatpush2.msra.mxu0 0.0
        %594 = vmatprep.subr.mxu0 0.0
        %595 = vmatpush2.msra.mxu0 0.0
        %596 = vmatprep.subr.mxu0 0.0
        %597 = vmatpush2.msra.mxu0 0.0
        %598 = vmatprep.subr.mxu0 0.0
        %599 = vmatpush2.msra.mxu0 0.0
        %600 = vmatprep.subr.mxu0 0.0
        %601 = vmatpush2.msra.mxu0 0.0
        %602 = vmatprep.subr.mxu0 0.0
        %603 = vmatpush2.msra.mxu0 0.0
        %604 = vmatprep.subr.mxu0 0.0
        %605 = vmatpush2.msra.mxu0 0.0
        %606 = vmatprep.subr.mxu0 0.0
        %607 = vmatpush2.msra.mxu0 0.0
        %608 = vmatprep.subr.mxu0 0.0
        %609 = vmatpush2.msra.mxu0 0.0
        %610 = vmatprep.subr.mxu0 0.0
        %611 = vmatpush2.msra.mxu0 0.0
        %612 = vmatprep.subr.mxu0 0.0
        %613 = vmatpush2.msra.mxu0 0.0
        %614 = vmatprep.subr.mxu0 0.0
        %615 = vmatpush2.msra.mxu0 0.0
        %616 = vmatprep.mubr.f32.mxu0 0.0
        %617 = vmatmul.mubr.f32.gmra.mxu0 %v512
        %v618 = vpop.f32.mrf.mxu0
        %v619 = vadd.f32 0.0, %v618
        %v620 = vpop.f32.mrf.mxu0
        %621 = vmatprep.mubr.f32.mxu0 0.0
        %622 = vmatmul.mubr.f32.gmra.mxu0 %v517
        %v623 = vpop.f32.mrf.mxu0
        %v624 = vadd.f32 0.0, %v623
        %v625 = vpop.f32.mrf.mxu0
        %626 = vdwg.mxu0
        %627 = vmatprep.subr.mxu0 0.0
        %628 = vmatpush1.msra.mxu0 %v535
        %629 = vmatprep.subr.mxu0 0.0
        %630 = vmatpush1.msra.mxu0 %v534
        %631 = vmatprep.subr.mxu0 0.0
        %632 = vmatpush1.msra.mxu0 %v533
        %633 = vmatprep.subr.mxu0 0.0
        %634 = vmatpush1.msra.mxu0 %v532
        %635 = vmatprep.subr.mxu0 0.0
        %636 = vmatpush1.msra.mxu0 %v531
        %637 = vmatprep.subr.mxu0 0.0
        %638 = vmatpush1.msra.mxu0 %v530
        %639 = vmatprep.subr.mxu0 0.0
        %640 = vmatpush1.msra.mxu0 %v529
        %641 = vmatprep.subr.mxu0 0.0
        %642 = vmatpush1.msra.mxu0 %v528
        %643 = vmatprep.subr.mxu0 0.0
        %644 = vmatpush1.msra.mxu0 %v527
        %645 = vmatprep.subr.mxu0 0.0
        %646 = vmatpush1.msra.mxu0 %v526
        %647 = vmatprep.subr.mxu0 0.0
        %648 = vmatpush1.msra.mxu0 %v525
        %649 = vmatprep.subr.mxu0 0.0
        %650 = vmatpush1.msra.mxu0 %v524
        %651 = vmatprep.subr.mxu0 0.0
        %652 = vmatpush1.msra.mxu0 %v523
        %653 = vmatprep.subr.mxu0 0.0
        %654 = vmatpush1.msra.mxu0 %v522
        %655 = vmatprep.subr.mxu0 0.0
        %656 = vmatpush1.msra.mxu0 %v521
        %657 = vmatprep.subr.mxu0 0.0
        %658 = vmatpush1.msra.mxu0 %v520
        %659 = vmatprep.subr.mxu0 0.0
        %660 = vmatpush2.msra.mxu0 0.0
        %661 = vmatprep.subr.mxu0 0.0
        %662 = vmatpush2.msra.mxu0 0.0
        %663 = vmatprep.subr.mxu0 0.0
        %664 = vmatpush2.msra.mxu0 0.0
        %665 = vmatprep.subr.mxu0 0.0
        %666 = vmatpush2.msra.mxu0 0.0
        %667 = vmatprep.subr.mxu0 0.0
        %668 = vmatpush2.msra.mxu0 0.0
        %669 = vmatprep.subr.mxu0 0.0
        %670 = vmatpush2.msra.mxu0 0.0
        %671 = vmatprep.subr.mxu0 0.0
        %672 = vmatpush2.msra.mxu0 0.0
        %673 = vmatprep.subr.mxu0 0.0
        %674 = vmatpush2.msra.mxu0 0.0
        %675 = vmatprep.subr.mxu0 0.0
        %676 = vmatpush2.msra.mxu0 0.0
        %677 = vmatprep.subr.mxu0 0.0
        %678 = vmatpush2.msra.mxu0 0.0
        %679 = vmatprep.subr.mxu0 0.0
        %680 = vmatpush2.msra.mxu0 0.0
        %681 = vmatprep.subr.mxu0 0.0
        %682 = vmatpush2.msra.mxu0 0.0
        %683 = vmatprep.subr.mxu0 0.0
        %684 = vmatpush2.msra.mxu0 0.0
        %685 = vmatprep.subr.mxu0 0.0
        %686 = vmatpush2.msra.mxu0 0.0
        %687 = vmatprep.subr.mxu0 0.0
        %688 = vmatpush2.msra.mxu0 0.0
        %689 = vmatprep.subr.mxu0 0.0
        %690 = vmatpush2.msra.mxu0 0.0
        %691 = vmatprep.mubr.f32.mxu0 0.0
        %692 = vmatmul.mubr.f32.gmra.mxu0 %v431
        %v693 = vpop.f32.mrf.mxu0
        %v694 = vadd.f32 %v619, %v693
        %v695 = vpop.f32.mrf.mxu0
        %696 = vmatprep.mubr.f32.mxu0 0.0
        %697 = vmatmul.mubr.f32.gmra.mxu0 %v432
        %v698 = vpop.f32.mrf.mxu0
        %v699 = vadd.f32 %v624, %v698
        %v700 = vpop.f32.mrf.mxu0
        %701 = vdwg.mxu0
        %v702 = vld [vmem:[%s5] sm:$0x1]
        %v704 = vlaneseq
        %v705 = vshrl.u32 %v704, 7
        %v706 = vsub.s32 0, %v705
        %v707 = vrot.slane %v702, %v706
        %v709 = vadd.f32 %v694, %v707
        %v710 = vadd.f32 %v699, %v707
        %v711 = vxor.u32 %v709, 2147483648
        %v712 = vxor.u32 %v710, 2147483648
        %v713 = vmul.f32 %v711, 1.442695
        %v714 = vpow.pop %v713
        %v715 = vmul.f32 %v712, 1.442695
        %v716 = vpow.pop %v715
        %v717 = vadd.f32 %v714, 1.0
        %v718 = vadd.f32 %v716, 1.0
        %v719 = vrcp.pop %v717
        %v720 = vmul.f32 1.0, %v719
        %v721 = vrcp.pop %v718
        %v722 = vmul.f32 1.0, %v721
        %v723 = vmul.f32 %v709, %v720
        %v724 = vmul.f32 %v710, %v722
        %v725 = vld [vmem:[%s6] sm:$0xff]
        %v726 = vld [vmem:[%s6 + $0x8] sm:$0xff]
        %v727 = vld [vmem:[%s6 + $0x10] sm:$0xff]
        %v728 = vld [vmem:[%s6 + $0x18] sm:$0xff]
        %v729 = vld [vmem:[%s6 + $0x20] sm:$0xff]
        %v730 = vld [vmem:[%s6 + $0x28] sm:$0xff]
        %v731 = vld [vmem:[%s6 + $0x30] sm:$0xff]
        %v732 = vld [vmem:[%s6 + $0x38] sm:$0xff]
        %v733 = vld [vmem:[%s6 + $0x40] sm:$0xff]
        %v734 = vld [vmem:[%s6 + $0x48] sm:$0xff]
        %v735 = vld [vmem:[%s6 + $0x50] sm:$0xff]
        %v736 = vld [vmem:[%s6 + $0x58] sm:$0xff]
        %v737 = vld [vmem:[%s6 + $0x60] sm:$0xff]
        %v738 = vld [vmem:[%s6 + $0x68] sm:$0xff]
        %v739 = vld [vmem:[%s6 + $0x70] sm:$0xff]
        %v740 = vld [vmem:[%s6 + $0x78] sm:$0xff]
        %v741 = vld [vmem:[%s7] sm:$0x1]
        %v743 = vlaneseq
        %v744 = vshrl.u32 %v743, 7
        %v745 = vsub.s32 0, %v744
        %v746 = vrot.slane %v741, %v745
        %748 = vmatprep.subr.mxu0 0.0
        %749 = vmatpush1.msra.mxu0 %v740
        %750 = vmatprep.subr.mxu0 0.0
        %751 = vmatpush1.msra.mxu0 %v739
        %752 = vmatprep.subr.mxu0 0.0
        %753 = vmatpush1.msra.mxu0 %v738
        %754 = vmatprep.subr.mxu0 0.0
        %755 = vmatpush1.msra.mxu0 %v737
        %756 = vmatprep.subr.mxu0 0.0
        %757 = vmatpush1.msra.mxu0 %v736
        %758 = vmatprep.subr.mxu0 0.0
        %759 = vmatpush1.msra.mxu0 %v735
        %760 = vmatprep.subr.mxu0 0.0
        %761 = vmatpush1.msra.mxu0 %v734
        %762 = vmatprep.subr.mxu0 0.0
        %763 = vmatpush1.msra.mxu0 %v733
        %764 = vmatprep.subr.mxu0 0.0
        %765 = vmatpush1.msra.mxu0 %v732
        %766 = vmatprep.subr.mxu0 0.0
        %767 = vmatpush1.msra.mxu0 %v731
        %768 = vmatprep.subr.mxu0 0.0
        %769 = vmatpush1.msra.mxu0 %v730
        %770 = vmatprep.subr.mxu0 0.0
        %771 = vmatpush1.msra.mxu0 %v729
        %772 = vmatprep.subr.mxu0 0.0
        %773 = vmatpush1.msra.mxu0 %v728
        %774 = vmatprep.subr.mxu0 0.0
        %775 = vmatpush1.msra.mxu0 %v727
        %776 = vmatprep.subr.mxu0 0.0
        %777 = vmatpush1.msra.mxu0 %v726
        %778 = vmatprep.subr.mxu0 0.0
        %779 = vmatpush1.msra.mxu0 %v725
        %780 = vmatprep.subr.mxu0 0.0
        %781 = vmatpush2.msra.mxu0 0.0
        %782 = vmatprep.subr.mxu0 0.0
        %783 = vmatpush2.msra.mxu0 0.0
        %784 = vmatprep.subr.mxu0 0.0
        %785 = vmatpush2.msra.mxu0 0.0
        %786 = vmatprep.subr.mxu0 0.0
        %787 = vmatpush2.msra.mxu0 0.0
        %788 = vmatprep.subr.mxu0 0.0
        %789 = vmatpush2.msra.mxu0 0.0
        %790 = vmatprep.subr.mxu0 0.0
        %791 = vmatpush2.msra.mxu0 0.0
        %792 = vmatprep.subr.mxu0 0.0
        %793 = vmatpush2.msra.mxu0 0.0
        %794 = vmatprep.subr.mxu0 0.0
        %795 = vmatpush2.msra.mxu0 0.0
        %796 = vmatprep.subr.mxu0 0.0
        %797 = vmatpush2.msra.mxu0 0.0
        %798 = vmatprep.subr.mxu0 0.0
        %799 = vmatpush2.msra.mxu0 0.0
        %800 = vmatprep.subr.mxu0 0.0
        %801 = vmatpush2.msra.mxu0 0.0
        %802 = vmatprep.subr.mxu0 0.0
        %803 = vmatpush2.msra.mxu0 0.0
        %804 = vmatprep.subr.mxu0 0.0
        %805 = vmatpush2.msra.mxu0 0.0
        %806 = vmatprep.subr.mxu0 0.0
        %807 = vmatpush2.msra.mxu0 0.0
        %808 = vmatprep.subr.mxu0 0.0
        %809 = vmatpush2.msra.mxu0 0.0
        %810 = vmatprep.subr.mxu0 0.0
        %811 = vmatpush2.msra.mxu0 0.0
        %812 = vmatprep.mubr.f32.mxu0 0.0
        %813 = vmatmul.mubr.f32.gmra.mxu0 %v723
        %v814 = vpop.f32.mrf.mxu0
        %v815 = vadd.f32 %v746, %v814
        %v816 = vpop.f32.mrf.mxu0
        %817 = vmatprep.mubr.f32.mxu0 0.0
        %818 = vmatmul.mubr.f32.gmra.mxu0 %v724
        %v819 = vpop.f32.mrf.mxu0
        %v820 = vadd.f32 %v746, %v819
        %v821 = vpop.f32.mrf.mxu0
        %822 = vdwg.mxu0
        %v823 = vxor.u32 %v815, 2147483648
        %v824 = vxor.u32 %v820, 2147483648
        %v825 = vmul.f32 %v823, 1.442695
        %v826 = vpow.pop %v825
        %v827 = vmul.f32 %v824, 1.442695
        %v828 = vpow.pop %v827
        %v829 = vadd.f32 %v826, 1.0
        %v830 = vadd.f32 %v828, 1.0
        %v831 = vrcp.pop %v829
        %v832 = vmul.f32 1.0, %v831
        %v833 = vrcp.pop %v830
        %v834 = vmul.f32 1.0, %v833
        %v835 = vmul.f32 %v815, %v832
        %v836 = vmul.f32 %v820, %v834
        %v837 = vld [vmem:[%s8] sm:$0xff]
        %v838 = vld [vmem:[%s8 + $0x8] sm:$0xff]
        %v839 = vld [vmem:[%s8 + $0x10] sm:$0xff]
        %v840 = vld [vmem:[%s8 + $0x18] sm:$0xff]
        %v841 = vld [vmem:[%s8 + $0x20] sm:$0xff]
        %v842 = vld [vmem:[%s8 + $0x28] sm:$0xff]
        %v843 = vld [vmem:[%s8 + $0x30] sm:$0xff]
        %v844 = vld [vmem:[%s8 + $0x38] sm:$0xff]
        %v845 = vld [vmem:[%s8 + $0x40] sm:$0xff]
        %v846 = vld [vmem:[%s8 + $0x48] sm:$0xff]
        %v847 = vld [vmem:[%s8 + $0x50] sm:$0xff]
        %v848 = vld [vmem:[%s8 + $0x58] sm:$0xff]
        %v849 = vld [vmem:[%s8 + $0x60] sm:$0xff]
        %v850 = vld [vmem:[%s8 + $0x68] sm:$0xff]
        %v851 = vld [vmem:[%s8 + $0x70] sm:$0xff]
        %v852 = vld [vmem:[%s8 + $0x78] sm:$0xff]
        %v853 = vld [vmem:[%s9] sm:$0x1]
        %v855 = vlaneseq
        %v856 = vshrl.u32 %v855, 7
        %v857 = vsub.s32 0, %v856
        %v858 = vrot.slane %v853, %v857
        %860 = vmatprep.subr.mxu0 0.0
        %861 = vmatpush1.msra.mxu0 %v852
        %862 = vmatprep.subr.mxu0 0.0
        %863 = vmatpush1.msra.mxu0 %v851
        %864 = vmatprep.subr.mxu0 0.0
        %865 = vmatpush1.msra.mxu0 %v850
        %866 = vmatprep.subr.mxu0 0.0
        %867 = vmatpush1.msra.mxu0 %v849
        %868 = vmatprep.subr.mxu0 0.0
        %869 = vmatpush1.msra.mxu0 %v848
        %870 = vmatprep.subr.mxu0 0.0
        %871 = vmatpush1.msra.mxu0 %v847
        %872 = vmatprep.subr.mxu0 0.0
        %873 = vmatpush1.msra.mxu0 %v846
        %874 = vmatprep.subr.mxu0 0.0
        %875 = vmatpush1.msra.mxu0 %v845
        %876 = vmatprep.subr.mxu0 0.0
        %877 = vmatpush1.msra.mxu0 %v844
        %878 = vmatprep.subr.mxu0 0.0
        %879 = vmatpush1.msra.mxu0 %v843
        %880 = vmatprep.subr.mxu0 0.0
        %881 = vmatpush1.msra.mxu0 %v842
        %882 = vmatprep.subr.mxu0 0.0
        %883 = vmatpush1.msra.mxu0 %v841
        %884 = vmatprep.subr.mxu0 0.0
        %885 = vmatpush1.msra.mxu0 %v840
        %886 = vmatprep.subr.mxu0 0.0
        %887 = vmatpush1.msra.mxu0 %v839
        %888 = vmatprep.subr.mxu0 0.0
        %889 = vmatpush1.msra.mxu0 %v838
        %890 = vmatprep.subr.mxu0 0.0
        %891 = vmatpush1.msra.mxu0 %v837
        %892 = vmatprep.subr.mxu0 0.0
        %893 = vmatpush2.msra.mxu0 0.0
        %894 = vmatprep.subr.mxu0 0.0
        %895 = vmatpush2.msra.mxu0 0.0
        %896 = vmatprep.subr.mxu0 0.0
        %897 = vmatpush2.msra.mxu0 0.0
        %898 = vmatprep.subr.mxu0 0.0
        %899 = vmatpush2.msra.mxu0 0.0
        %900 = vmatprep.subr.mxu0 0.0
        %901 = vmatpush2.msra.mxu0 0.0
        %902 = vmatprep.subr.mxu0 0.0
        %903 = vmatpush2.msra.mxu0 0.0
        %904 = vmatprep.subr.mxu0 0.0
        %905 = vmatpush2.msra.mxu0 0.0
        %906 = vmatprep.subr.mxu0 0.0
        %907 = vmatpush2.msra.mxu0 0.0
        %908 = vmatprep.subr.mxu0 0.0
        %909 = vmatpush2.msra.mxu0 0.0
        %910 = vmatprep.subr.mxu0 0.0
        %911 = vmatpush2.msra.mxu0 0.0
        %912 = vmatprep.subr.mxu0 0.0
        %913 = vmatpush2.msra.mxu0 0.0
        %914 = vmatprep.subr.mxu0 0.0
        %915 = vmatpush2.msra.mxu0 0.0
        %916 = vmatprep.subr.mxu0 0.0
        %917 = vmatpush2.msra.mxu0 0.0
        %918 = vmatprep.subr.mxu0 0.0
        %919 = vmatpush2.msra.mxu0 0.0
        %920 = vmatprep.subr.mxu0 0.0
        %921 = vmatpush2.msra.mxu0 0.0
        %922 = vmatprep.subr.mxu0 0.0
        %923 = vmatpush2.msra.mxu0 0.0
        %924 = vmatprep.mubr.f32.mxu0 0.0
        %925 = vmatmul.mubr.f32.gmra.mxu0 %v835
        %v926 = vpop.f32.mrf.mxu0
        %v927 = vadd.f32 %v858, %v926
        %v928 = vpop.f32.mrf.mxu0
        %929 = vmatprep.mubr.f32.mxu0 0.0
        %930 = vmatmul.mubr.f32.gmra.mxu0 %v836
        %v931 = vpop.f32.mrf.mxu0
        %v932 = vadd.f32 %v858, %v931
        %v933 = vpop.f32.mrf.mxu0
        %934 = vdwg.mxu0
        %935 = vst [vmem:[%s408] sm:$0xff] %v927
        %936 = vst [vmem:[%s408 + $0x8] sm:$0xff] %v932
        %s937 = sand.u32 %s273, 1
        %s938 = scalar_lea.sflag [#allocation3], %s937
        %s939 = sand.u32 %s273, 1
        %s940 = smul.addr %s939, 16
        %s941 = scalar_lea.vmem [#allocation2], %s940
        // Predicated region
        $region61: #{node_model_forward.1} parent=59 // pred_check
          %p942 = pneg %p283
        $region62: #{node_model_forward.1} parent=59 // pred_check_branch
          %944 = sbr.rel (%p942) target = $region64
        $region63: #{node_model_forward.1} parent=59 // pred_region
          %s945 = smul.u32 2, %s29
          %s947 = ssub.s32 256, 256
          %948 = vsyncadd %s938, %s947
          %s949 = smul.addr %s28, 2
          %s950 = sadd.s32 %s945, %s949
          %s951 = smul.addr %s950, 128
          %s952 = scalar_lea.hbm %s10, %s951
          %s953 = sshll.u32 %s941, 4
          %s954 = int_to_ptr.vmem [resolvable:$true] %s953
          %959 = dma.vmem_to_hbm [thread:$0]  %s954, 256, %s952, %s938, 128, 128, 8
        $region64: #{node_model_forward.1} parent=59 // pred_fallthru
          _
      $region60: #{node_model_forward.1} parent=5 // pred_fallthru
        _
      %p960 = scmp.le.s32.totalorder 2, %s19
      // Predicated region
      $region65: #{node_model_forward.1} parent=5 // pred_check
        %p961 = pneg %p960
      $region66: #{node_model_forward.1} parent=5 // pred_check_branch
        %963 = sbr.rel (%p961) target = $region68
      $region67: #{node_model_forward.1} parent=5 // pred_region
        %s964 = ssub.s32 %s19, 2
        // Predicated region
        $region69: #{node_model_forward.1} parent=67 // pred_check
          %p965 = pneg %p289
        $region70: #{node_model_forward.1} parent=67 // pred_check_branch
          %967 = sbr.rel (%p965) target = $region72
        $region71: #{node_model_forward.1} parent=67 // pred_region
          %s968 = sand.u32 %s274, 1
          %s969 = scalar_lea.sflag [#allocation3], %s968
          %s970 = sand.u32 %s274, 1
          %s971 = smul.addr %s970, 16
          %s972 = scalar_lea.vmem [#allocation2], %s971
          %973 = dma.done %s969, 256
        $region72: #{node_model_forward.1} parent=67 // pred_fallthru
          _
      $region68: #{node_model_forward.1} parent=5 // pred_fallthru
        _
    $region6: #{node_model_forward.1} parent=1 // loop_footer
      %s23 = sadd.s32 1, %s19
    $region7: #{node_model_forward.1} parent=1 // loop_footer_branch
      %18 = sbr.rel target = $region3
    $region8: #{node_model_forward.1} parent=1 // loop_exit
      _
    %974 = vsyncpa [#allocation3], 1
    %s975 = scalar_lea.sflag [#allocation3], 1
    %976 = vsyncpa %s975, 1

</llo_original>
